<compile_context>
chip_gen: v6e
topology: v6e:2x2x1
jax: 0.10.0
libtpu: 0.0.40
codegen_flags: <defaults>
</compile_context>

<pallas_src>
import functools

import numpy as np
import jax
import jax.numpy as jnp
from jax import lax
from jax.experimental import pallas as pl
from jax.experimental.pallas import tpu as pltpu


def _facemesh_kernel(xf_ref, dww_ref, wcat_ref, pvec_ref, out_ref, *, H, W):
    """Whole batch in one step.

    xf_ref  : (B, Cin, (H+4)*W)  height-padded (2 rows each side), flattened spatial
    dww_ref : (9, Cin, 1)        depthwise 3x3 weights, row k = kh_idx*3 + kw_idx
    wcat_ref: (Cout, 2*Cin)      [pointwise 1x1 | identity-channel-pad] fused weights
    pvec_ref: (2, Cout, 1)       row 0 = effective pointwise bias, row 1 = PReLU alpha
    out_ref : (B, Cout, H*W)
    """
    B = xf_ref.shape[0]
    HW = H * W
    base = 2 * W  # flat index of output position (h=0, w=0) in the padded image

    xf = xf_ref[...]           # (B, Cin, Lp)
    dww = dww_ref[...]         # (9, Cin, 1)
    wcat = wcat_ref[...]       # (Cout, 2*Cin)
    pvec = pvec_ref[...]       # (2, Cout, 1)
    bias = pvec[0]             # (Cout, 1)
    alpha = pvec[1]            # (Cout, 1)

    # Column masks for width-edge taps (width is NOT pre-padded; taps that
    # "wrap" into the neighbouring row are zeroed here). Hoisted, used once.
    col = lax.broadcasted_iota(jnp.int32, (1, 1, HW), 2) % W
    keep_l = (col != 0).astype(jnp.float32)        # for kw == -1 taps
    keep_r = (col != (W - 1)).astype(jnp.float32)  # for kw == +1 taps

    # Center tap doubles as the residual input (original x, valid region).
    xc = xf[:, :, base:base + HW]                                  # (B, Cin, HW)

    # ---- depthwise 3x3, stride 1 (VPU; lane-offset slices, grouped by kw) ----
    acc = xc * dww[4]                                              # (kh= 0, kw= 0)
    acc = acc + xf[:, :, base - W:base - W + HW] * dww[1]          # (kh=-1, kw= 0)
    acc = acc + xf[:, :, base + W:base + W + HW] * dww[7]          # (kh=+1, kw= 0)

    left = xf[:, :, base - W - 1:base - W - 1 + HW] * dww[0]       # (kh=-1, kw=-1)
    left = left + xf[:, :, base - 1:base - 1 + HW] * dww[3]        # (kh= 0, kw=-1)
    left = left + xf[:, :, base + W - 1:base + W - 1 + HW] * dww[6]
    acc = acc + left * keep_l

    right = xf[:, :, base - W + 1:base - W + 1 + HW] * dww[2]      # (kh=-1, kw=+1)
    right = right + xf[:, :, base + 1:base + 1 + HW] * dww[5]      # (kh= 0, kw=+1)
    right = right + xf[:, :, base + W + 1:base + W + 1 + HW] * dww[8]
    acc = acc + right * keep_r

    # ---- fused 1x1 conv + channel-pad residual (one MXU matmul per batch) ----
    for b in range(B):  # B is a small static constant
        rhs = jnp.concatenate([acc[b], xc[b]], axis=0)             # (2*Cin, HW)
        y = jnp.dot(wcat, rhs, preferred_element_type=jnp.float32) # (Cout, HW)
        y = y + bias
        y = jnp.where(y > 0, y, alpha * y)                         # PReLU
        out_ref[b] = y                                             # lane-dense store


def facemesh_block(x_nchw, dw_w, dw_b, pw_w, pw_b, alpha):
    """stride=1, kernel_size=3 FaceMeshBlock forward.

    x_nchw : (B, Cin, H, W) float32
    dw_w   : (Cin, 1, 3, 3)    depthwise conv weight (groups=Cin)
    dw_b   : (Cin,)
    pw_w   : (Cout, Cin, 1, 1) pointwise conv weight
    pw_b   : (Cout,)
    alpha  : (Cout,)           PReLU slopes
    returns: (B, Cout, H, W) float32
    """
    B, Cin, H, W = x_nchw.shape
    Cout = pw_w.shape[0]
    assert Cout >= Cin, "channel_pad must be >= 0 for this block"
    HW = H * W
    Lp = (H + 4) * W

    # ---- layout plumbing / parameter repacking (plain JAX, no transposes) ----
    x = x_nchw.astype(jnp.float32)
    xf = jnp.pad(x, ((0, 0), (0, 0), (2, 2), (0, 0))).reshape(B, Cin, Lp)

    # depthwise weights -> (9, Cin, 1), row k = kh_idx*3 + kw_idx
    dww = jnp.transpose(dw_w[:, 0].reshape(Cin, 9), (1, 0)).reshape(9, Cin, 1)
    dww = dww.astype(jnp.float32)

    # fused pointwise + identity-channel-pad weights: (Cout, 2*Cin)
    pww = pw_w[:, :, 0, 0].astype(jnp.float32)                      # (Cout, Cin)
    wcat = jnp.concatenate([pww, jnp.eye(Cout, Cin, dtype=jnp.float32)], axis=1)

    # fold the depthwise bias through the 1x1 conv into one effective bias
    bias_eff = jnp.sum(pww * dw_b.astype(jnp.float32)[None, :], axis=1) \
        + pw_b.astype(jnp.float32)                                  # (Cout,)
    pvec = jnp.stack([bias_eff, alpha.astype(jnp.float32)]).reshape(2, Cout, 1)

    kernel = functools.partial(_facemesh_kernel, H=H, W=W)

    out_flat = pl.pallas_call(
        kernel,
        out_shape=jax.ShapeDtypeStruct((B, Cout, HW), jnp.float32),
        grid=(1,),  # whole batch in a single step (tiny problem; see header note)
        in_specs=[
            pl.BlockSpec((B, Cin, Lp), lambda i: (0, 0, 0)),
            pl.BlockSpec((9, Cin, 1), lambda i: (0, 0, 0)),
            pl.BlockSpec((Cout, 2 * Cin), lambda i: (0, 0)),
            pl.BlockSpec((2, Cout, 1), lambda i: (0, 0, 0)),
        ],
        out_specs=pl.BlockSpec((B, Cout, HW), lambda i: (0, 0, 0)),
        compiler_params=pltpu.CompilerParams(dimension_semantics=("arbitrary",)),
    )(xf, dww, wcat, pvec)

    return out_flat.reshape(B, Cout, H, W)


def reference_forward(x_nchw, dw_w, dw_b, pw_w, pw_b, alpha):
    """Pure-JAX (XLA conv) reference of the PyTorch forward, stride=1."""
    B, Cin, H, W = x_nchw.shape
    Cout = pw_w.shape[0]
    dn = ("NCHW", "OIHW", "NCHW")
    h = x_nchw
    dw = lax.conv_general_dilated(
        h, dw_w, window_strides=(1, 1), padding=((1, 1), (1, 1)),
        dimension_numbers=dn, feature_group_count=Cin) + dw_b[None, :, None, None]
    pw = lax.conv_general_dilated(
        dw, pw_w, window_strides=(1, 1), padding="VALID",
        dimension_numbers=dn) + pw_b[None, :, None, None]
    xres = jnp.pad(x_nchw, ((0, 0), (0, Cout - Cin), (0, 0), (0, 0)))
    y = pw + xres
    return jnp.where(y > 0, y, alpha[None, :, None, None] * y)


if __name__ == "__main__":
    B, Cin, Cout, H, W = 2, 4, 8, 16, 16

    key = jax.random.PRNGKey(0)
    kx, k1, k2, k3, k4, k5 = jax.random.split(key, 6)

    x = jax.random.normal(kx, (B, Cin, H, W), dtype=jnp.float32)

    # deterministic synthetic parameters (shapes from nn.Module __init__)
    dw_w = 0.2 * jax.random.normal(k1, (Cin, 1, 3, 3), dtype=jnp.float32)     # depthwise conv
    dw_b = 0.1 * jax.random.normal(k2, (Cin,), dtype=jnp.float32)
    pw_w = 0.2 * jax.random.normal(k3, (Cout, Cin, 1, 1), dtype=jnp.float32)  # 1x1 conv
    pw_b = 0.1 * jax.random.normal(k4, (Cout,), dtype=jnp.float32)
    alpha = jax.random.uniform(k5, (Cout,), minval=0.1, maxval=0.5,
                               dtype=jnp.float32)                             # PReLU slopes

    out = facemesh_block(x, dw_w, dw_b, pw_w, pw_b, alpha)
    out = jax.block_until_ready(out)

    ref = jax.block_until_ready(reference_forward(x, dw_w, dw_b, pw_w, pw_b, alpha))
    assert out.shape == (B, Cout, H, W)
    assert np.allclose(np.asarray(out), np.asarray(ref), atol=1e-4, rtol=1e-4), \
        "Pallas kernel mismatch vs JAX reference"

    print("KERNEL_OK")
</pallas_src>

<mosaic_0001>
module attributes {stable_mosaic.version = 11 : i64} {
  func.func @_facemesh_kernel(%arg0: i32, %arg1: memref<2x4x320xf32, #tpu.memory_space<vmem>>, %arg2: memref<9x4x1xf32, #tpu.memory_space<vmem>>, %arg3: memref<8x8xf32, #tpu.memory_space<vmem>>, %arg4: memref<2x8x1xf32, #tpu.memory_space<vmem>>, %arg5: memref<2x8x256xf32, #tpu.memory_space<vmem>>) attributes {dimension_semantics = [#tpu.dimension_semantics<arbitrary>], iteration_bounds = array<i64: 1>, scalar_prefetch = 0 : i64, scratch_operands = 0 : i64, tpu.core_type = #tpu.core_type<tc>, window_params = [{pipeline_mode = #tpu.pipeline_mode<synchronous>, transform_indices = @transform_0, window_bounds = array<i64: 2, 4, 320>}, {pipeline_mode = #tpu.pipeline_mode<synchronous>, transform_indices = @transform_1, window_bounds = array<i64: 9, 4, 1>}, {pipeline_mode = #tpu.pipeline_mode<synchronous>, transform_indices = @transform_2, window_bounds = array<i64: 8, 8>}, {pipeline_mode = #tpu.pipeline_mode<synchronous>, transform_indices = @transform_3, window_bounds = array<i64: 2, 8, 1>}, {pipeline_mode = #tpu.pipeline_mode<synchronous>, transform_indices = @transform_4, window_bounds = array<i64: 2, 8, 256>}]} {
    %c0 = arith.constant 0 : index
    %c0_0 = arith.constant 0 : index
    %c0_1 = arith.constant 0 : index
    %0 = vector.load %arg1[%c0, %c0_0, %c0_1] : memref<2x4x320xf32, #tpu.memory_space<vmem>>, vector<2x4x320xf32>
    %c0_2 = arith.constant 0 : index
    %c0_3 = arith.constant 0 : index
    %c0_4 = arith.constant 0 : index
    %1 = vector.load %arg2[%c0_2, %c0_3, %c0_4] : memref<9x4x1xf32, #tpu.memory_space<vmem>>, vector<9x4x1xf32>
    %c0_5 = arith.constant 0 : index
    %c0_6 = arith.constant 0 : index
    %2 = vector.load %arg3[%c0_5, %c0_6] : memref<8x8xf32, #tpu.memory_space<vmem>>, vector<8x8xf32>
    %c0_7 = arith.constant 0 : index
    %c0_8 = arith.constant 0 : index
    %c0_9 = arith.constant 0 : index
    %3 = vector.load %arg4[%c0_7, %c0_8, %c0_9] : memref<2x8x1xf32, #tpu.memory_space<vmem>>, vector<2x8x1xf32>
    %4 = vector.extract_strided_slice %3 {offsets = [0, 0, 0], sizes = [1, 8, 1], strides = [1, 1, 1]} : vector<2x8x1xf32> to vector<1x8x1xf32>
    %5 = vector.shape_cast %4 : vector<1x8x1xf32> to vector<8x1xf32>
    %6 = vector.extract_strided_slice %3 {offsets = [1, 0, 0], sizes = [1, 8, 1], strides = [1, 1, 1]} : vector<2x8x1xf32> to vector<1x8x1xf32>
    %7 = vector.shape_cast %6 : vector<1x8x1xf32> to vector<8x1xf32>
    %8 = tpu.iota {dimensions = array<i32: 2>} : vector<1x1x256xi32>
    %c16_i32 = arith.constant 16 : i32
    %c0_i32 = arith.constant 0 : i32
    %9 = arith.cmpi eq, %c16_i32, %c0_i32 : i32
    %c1_i32 = arith.constant 1 : i32
    %10 = arith.select %9, %c1_i32, %c16_i32 : i32
    %11 = vector.broadcast %10 : i32 to vector<1x1x256xi32>
    %12 = arith.remsi %8, %11 : vector<1x1x256xi32>
    %c0_i32_10 = arith.constant 0 : i32
    %13 = vector.broadcast %c0_i32_10 : i32 to vector<1x1x256xi32>
    %14 = arith.cmpi ne, %12, %13 : vector<1x1x256xi32>
    %c0_i32_11 = arith.constant 0 : i32
    %15 = vector.broadcast %c0_i32_11 : i32 to vector<1x1x256xi32>
    %16 = arith.cmpi slt, %12, %15 : vector<1x1x256xi32>
    %c0_i32_12 = arith.constant 0 : i32
    %17 = arith.cmpi slt, %10, %c0_i32_12 : i32
    %18 = vector.broadcast %17 : i1 to vector<1x1x256xi1>
    %19 = vector.broadcast %18 : vector<1x1x256xi1> to vector<1x1x256xi1>
    %20 = arith.xori %16, %19 : vector<1x1x256xi1>
    %21 = arith.andi %20, %14 : vector<1x1x256xi1>
    %22 = vector.broadcast %10 : i32 to vector<1x1x256xi32>
    %23 = arith.addi %12, %22 : vector<1x1x256xi32>
    %24 = arith.select %21, %23, %12 : vector<1x1x256xi1>, vector<1x1x256xi32>
    %c0_i32_13 = arith.constant 0 : i32
    %25 = vector.broadcast %c0_i32_13 : i32 to vector<1x1x256xi32>
    %26 = arith.cmpi ne, %24, %25 : vector<1x1x256xi32>
    %27 = arith.extui %26 : vector<1x1x256xi1> to vector<1x1x256xi32>
    %28 = arith.sitofp %27 : vector<1x1x256xi32> to vector<1x1x256xf32>
    %c15_i32 = arith.constant 15 : i32
    %29 = vector.broadcast %c15_i32 : i32 to vector<1x1x256xi32>
    %30 = arith.cmpi ne, %24, %29 : vector<1x1x256xi32>
    %31 = arith.extui %30 : vector<1x1x256xi1> to vector<1x1x256xi32>
    %32 = arith.sitofp %31 : vector<1x1x256xi32> to vector<1x1x256xf32>
    %33 = vector.extract_strided_slice %0 {offsets = [0, 0, 32], sizes = [2, 4, 256], strides = [1, 1, 1]} : vector<2x4x320xf32> to vector<2x4x256xf32>
    %34 = vector.extract_strided_slice %1 {offsets = [4, 0, 0], sizes = [1, 4, 1], strides = [1, 1, 1]} : vector<9x4x1xf32> to vector<1x4x1xf32>
    %35 = vector.shape_cast %34 : vector<1x4x1xf32> to vector<4x1xf32>
    %36 = vector.shape_cast %35 : vector<4x1xf32> to vector<1x4x1xf32>
    %37 = vector.broadcast %36 : vector<1x4x1xf32> to vector<2x4x256xf32>
    %38 = arith.mulf %33, %37 : vector<2x4x256xf32>
    %39 = vector.extract_strided_slice %0 {offsets = [0, 0, 16], sizes = [2, 4, 256], strides = [1, 1, 1]} : vector<2x4x320xf32> to vector<2x4x256xf32>
    %40 = vector.extract_strided_slice %1 {offsets = [1, 0, 0], sizes = [1, 4, 1], strides = [1, 1, 1]} : vector<9x4x1xf32> to vector<1x4x1xf32>
    %41 = vector.shape_cast %40 : vector<1x4x1xf32> to vector<4x1xf32>
    %42 = vector.shape_cast %41 : vector<4x1xf32> to vector<1x4x1xf32>
    %43 = vector.broadcast %42 : vector<1x4x1xf32> to vector<2x4x256xf32>
    %44 = arith.mulf %39, %43 : vector<2x4x256xf32>
    %45 = arith.addf %38, %44 : vector<2x4x256xf32>
    %46 = vector.extract_strided_slice %0 {offsets = [0, 0, 48], sizes = [2, 4, 256], strides = [1, 1, 1]} : vector<2x4x320xf32> to vector<2x4x256xf32>
    %47 = vector.extract_strided_slice %1 {offsets = [7, 0, 0], sizes = [1, 4, 1], strides = [1, 1, 1]} : vector<9x4x1xf32> to vector<1x4x1xf32>
    %48 = vector.shape_cast %47 : vector<1x4x1xf32> to vector<4x1xf32>
    %49 = vector.shape_cast %48 : vector<4x1xf32> to vector<1x4x1xf32>
    %50 = vector.broadcast %49 : vector<1x4x1xf32> to vector<2x4x256xf32>
    %51 = arith.mulf %46, %50 : vector<2x4x256xf32>
    %52 = arith.addf %45, %51 : vector<2x4x256xf32>
    %53 = vector.extract_strided_slice %0 {offsets = [0, 0, 15], sizes = [2, 4, 256], strides = [1, 1, 1]} : vector<2x4x320xf32> to vector<2x4x256xf32>
    %54 = vector.extract_strided_slice %1 {offsets = [0, 0, 0], sizes = [1, 4, 1], strides = [1, 1, 1]} : vector<9x4x1xf32> to vector<1x4x1xf32>
    %55 = vector.shape_cast %54 : vector<1x4x1xf32> to vector<4x1xf32>
    %56 = vector.shape_cast %55 : vector<4x1xf32> to vector<1x4x1xf32>
    %57 = vector.broadcast %56 : vector<1x4x1xf32> to vector<2x4x256xf32>
    %58 = arith.mulf %53, %57 : vector<2x4x256xf32>
    %59 = vector.extract_strided_slice %0 {offsets = [0, 0, 31], sizes = [2, 4, 256], strides = [1, 1, 1]} : vector<2x4x320xf32> to vector<2x4x256xf32>
    %60 = vector.extract_strided_slice %1 {offsets = [3, 0, 0], sizes = [1, 4, 1], strides = [1, 1, 1]} : vector<9x4x1xf32> to vector<1x4x1xf32>
    %61 = vector.shape_cast %60 : vector<1x4x1xf32> to vector<4x1xf32>
    %62 = vector.shape_cast %61 : vector<4x1xf32> to vector<1x4x1xf32>
    %63 = vector.broadcast %62 : vector<1x4x1xf32> to vector<2x4x256xf32>
    %64 = arith.mulf %59, %63 : vector<2x4x256xf32>
    %65 = arith.addf %58, %64 : vector<2x4x256xf32>
    %66 = vector.extract_strided_slice %0 {offsets = [0, 0, 47], sizes = [2, 4, 256], strides = [1, 1, 1]} : vector<2x4x320xf32> to vector<2x4x256xf32>
    %67 = vector.extract_strided_slice %1 {offsets = [6, 0, 0], sizes = [1, 4, 1], strides = [1, 1, 1]} : vector<9x4x1xf32> to vector<1x4x1xf32>
    %68 = vector.shape_cast %67 : vector<1x4x1xf32> to vector<4x1xf32>
    %69 = vector.shape_cast %68 : vector<4x1xf32> to vector<1x4x1xf32>
    %70 = vector.broadcast %69 : vector<1x4x1xf32> to vector<2x4x256xf32>
    %71 = arith.mulf %66, %70 : vector<2x4x256xf32>
    %72 = arith.addf %65, %71 : vector<2x4x256xf32>
    %73 = vector.broadcast %28 : vector<1x1x256xf32> to vector<2x4x256xf32>
    %74 = arith.mulf %72, %73 : vector<2x4x256xf32>
    %75 = arith.addf %52, %74 : vector<2x4x256xf32>
    %76 = vector.extract_strided_slice %0 {offsets = [0, 0, 17], sizes = [2, 4, 256], strides = [1, 1, 1]} : vector<2x4x320xf32> to vector<2x4x256xf32>
    %77 = vector.extract_strided_slice %1 {offsets = [2, 0, 0], sizes = [1, 4, 1], strides = [1, 1, 1]} : vector<9x4x1xf32> to vector<1x4x1xf32>
    %78 = vector.shape_cast %77 : vector<1x4x1xf32> to vector<4x1xf32>
    %79 = vector.shape_cast %78 : vector<4x1xf32> to vector<1x4x1xf32>
    %80 = vector.broadcast %79 : vector<1x4x1xf32> to vector<2x4x256xf32>
    %81 = arith.mulf %76, %80 : vector<2x4x256xf32>
    %82 = vector.extract_strided_slice %0 {offsets = [0, 0, 33], sizes = [2, 4, 256], strides = [1, 1, 1]} : vector<2x4x320xf32> to vector<2x4x256xf32>
    %83 = vector.extract_strided_slice %1 {offsets = [5, 0, 0], sizes = [1, 4, 1], strides = [1, 1, 1]} : vector<9x4x1xf32> to vector<1x4x1xf32>
    %84 = vector.shape_cast %83 : vector<1x4x1xf32> to vector<4x1xf32>
    %85 = vector.shape_cast %84 : vector<4x1xf32> to vector<1x4x1xf32>
    %86 = vector.broadcast %85 : vector<1x4x1xf32> to vector<2x4x256xf32>
    %87 = arith.mulf %82, %86 : vector<2x4x256xf32>
    %88 = arith.addf %81, %87 : vector<2x4x256xf32>
    %89 = vector.extract_strided_slice %0 {offsets = [0, 0, 49], sizes = [2, 4, 256], strides = [1, 1, 1]} : vector<2x4x320xf32> to vector<2x4x256xf32>
    %90 = vector.extract_strided_slice %1 {offsets = [8, 0, 0], sizes = [1, 4, 1], strides = [1, 1, 1]} : vector<9x4x1xf32> to vector<1x4x1xf32>
    %91 = vector.shape_cast %90 : vector<1x4x1xf32> to vector<4x1xf32>
    %92 = vector.shape_cast %91 : vector<4x1xf32> to vector<1x4x1xf32>
    %93 = vector.broadcast %92 : vector<1x4x1xf32> to vector<2x4x256xf32>
    %94 = arith.mulf %89, %93 : vector<2x4x256xf32>
    %95 = arith.addf %88, %94 : vector<2x4x256xf32>
    %96 = vector.broadcast %32 : vector<1x1x256xf32> to vector<2x4x256xf32>
    %97 = arith.mulf %95, %96 : vector<2x4x256xf32>
    %98 = arith.addf %75, %97 : vector<2x4x256xf32>
    %99 = vector.extract_strided_slice %98 {offsets = [0, 0, 0], sizes = [1, 4, 256], strides = [1, 1, 1]} : vector<2x4x256xf32> to vector<1x4x256xf32>
    %100 = vector.shape_cast %99 : vector<1x4x256xf32> to vector<4x256xf32>
    %101 = vector.extract_strided_slice %33 {offsets = [0, 0, 0], sizes = [1, 4, 256], strides = [1, 1, 1]} : vector<2x4x256xf32> to vector<1x4x256xf32>
    %102 = vector.shape_cast %101 : vector<1x4x256xf32> to vector<4x256xf32>
    %103 = tpu.concatenate %100, %102 in 0 : vector<4x256xf32>, vector<4x256xf32> -> vector<8x256xf32>
    %cst = arith.constant dense<0.000000e+00> : vector<8x256xf32>
    %104 = tpu.matmul %2, %103, %cst {dimension_numbers = #tpu.dot_dimension_numbers<[1], [0], [0], [1], [0, 0, 1, 1], [], []>} : vector<8x8xf32>, vector<8x256xf32>, vector<8x256xf32> -> vector<8x256xf32>
    %105 = vector.broadcast %5 : vector<8x1xf32> to vector<8x256xf32>
    %106 = arith.addf %104, %105 : vector<8x256xf32>
    %cst_14 = arith.constant 0.000000e+00 : f32
    %107 = vector.broadcast %cst_14 : f32 to vector<8x256xf32>
    %108 = arith.cmpf ogt, %106, %107 : vector<8x256xf32>
    %109 = vector.broadcast %7 : vector<8x1xf32> to vector<8x256xf32>
    %110 = arith.mulf %109, %106 : vector<8x256xf32>
    %111 = arith.select %108, %106, %110 : vector<8x256xi1>, vector<8x256xf32>
    %c0_15 = arith.constant 0 : index
    %c0_16 = arith.constant 0 : index
    %c0_17 = arith.constant 0 : index
    %112 = vector.load %arg5[%c0_15, %c0_16, %c0_17] : memref<2x8x256xf32, #tpu.memory_space<vmem>>, vector<1x8x256xf32>
    %113 = vector.shape_cast %112 : vector<1x8x256xf32> to vector<8x256xf32>
    %114 = vector.shape_cast %111 : vector<8x256xf32> to vector<1x8x256xf32>
    tpu.vector_store %arg5[%c0_15, %c0_16, %c0_17], %114 {strides = array<i32>} : memref<2x8x256xf32, #tpu.memory_space<vmem>>, vector<1x8x256xf32>,
    %115 = vector.extract_strided_slice %98 {offsets = [1, 0, 0], sizes = [1, 4, 256], strides = [1, 1, 1]} : vector<2x4x256xf32> to vector<1x4x256xf32>
    %116 = vector.shape_cast %115 : vector<1x4x256xf32> to vector<4x256xf32>
    %117 = vector.extract_strided_slice %33 {offsets = [1, 0, 0], sizes = [1, 4, 256], strides = [1, 1, 1]} : vector<2x4x256xf32> to vector<1x4x256xf32>
    %118 = vector.shape_cast %117 : vector<1x4x256xf32> to vector<4x256xf32>
    %119 = tpu.concatenate %116, %118 in 0 : vector<4x256xf32>, vector<4x256xf32> -> vector<8x256xf32>
    %cst_18 = arith.constant dense<0.000000e+00> : vector<8x256xf32>
    %120 = tpu.matmul %2, %119, %cst_18 {dimension_numbers = #tpu.dot_dimension_numbers<[1], [0], [0], [1], [0, 0, 1, 1], [], []>} : vector<8x8xf32>, vector<8x256xf32>, vector<8x256xf32> -> vector<8x256xf32>
    %121 = vector.broadcast %5 : vector<8x1xf32> to vector<8x256xf32>
    %122 = arith.addf %120, %121 : vector<8x256xf32>
    %cst_19 = arith.constant 0.000000e+00 : f32
    %123 = vector.broadcast %cst_19 : f32 to vector<8x256xf32>
    %124 = arith.cmpf ogt, %122, %123 : vector<8x256xf32>
    %125 = vector.broadcast %7 : vector<8x1xf32> to vector<8x256xf32>
    %126 = arith.mulf %125, %122 : vector<8x256xf32>
    %127 = arith.select %124, %122, %126 : vector<8x256xi1>, vector<8x256xf32>
    %c1 = arith.constant 1 : index
    %c0_20 = arith.constant 0 : index
    %c0_21 = arith.constant 0 : index
    %128 = vector.load %arg5[%c1, %c0_20, %c0_21] : memref<2x8x256xf32, #tpu.memory_space<vmem>>, vector<1x8x256xf32>
    %129 = vector.shape_cast %128 : vector<1x8x256xf32> to vector<8x256xf32>
    %130 = vector.shape_cast %127 : vector<8x256xf32> to vector<1x8x256xf32>
    tpu.vector_store %arg5[%c1, %c0_20, %c0_21], %130 {strides = array<i32>} : memref<2x8x256xf32, #tpu.memory_space<vmem>>, vector<1x8x256xf32>,
    return
  }
  func.func @transform_0(%arg0: i32) -> (i32, i32, i32) {
    %c0_i32 = arith.constant 0 : i32
    %c0_i32_0 = arith.constant 0 : i32
    %c0_i32_1 = arith.constant 0 : i32
    %c0_i32_2 = arith.constant 0 : i32
    return %c0_i32, %c0_i32_0, %c0_i32_1 : i32, i32, i32
  }
  func.func @transform_1(%arg0: i32) -> (i32, i32, i32) {
    %c0_i32 = arith.constant 0 : i32
    %c0_i32_0 = arith.constant 0 : i32
    %c0_i32_1 = arith.constant 0 : i32
    %c0_i32_2 = arith.constant 0 : i32
    return %c0_i32, %c0_i32_0, %c0_i32_1 : i32, i32, i32
  }
  func.func @transform_2(%arg0: i32) -> (i32, i32) {
    %c0_i32 = arith.constant 0 : i32
    %c0_i32_0 = arith.constant 0 : i32
    %c0_i32_1 = arith.constant 0 : i32
    return %c0_i32, %c0_i32_0 : i32, i32
  }
  func.func @transform_3(%arg0: i32) -> (i32, i32, i32) {
    %c0_i32 = arith.constant 0 : i32
    %c0_i32_0 = arith.constant 0 : i32
    %c0_i32_1 = arith.constant 0 : i32
    %c0_i32_2 = arith.constant 0 : i32
    return %c0_i32, %c0_i32_0, %c0_i32_1 : i32, i32, i32
  }
  func.func @transform_4(%arg0: i32) -> (i32, i32, i32) {
    %c0_i32 = arith.constant 0 : i32
    %c0_i32_0 = arith.constant 0 : i32
    %c0_i32_1 = arith.constant 0 : i32
    %c0_i32_2 = arith.constant 0 : i32
    return %c0_i32, %c0_i32_0, %c0_i32_1 : i32, i32, i32
  }
}

</mosaic_0001>

<llo_original>
// kernel: tpu_custom_call.1
$region0: #{tpu_custom_call.1}
  #allocation0 [shape = 'u32[]', space=smem, size = 0x4, offset = 0x4, fixed_abs, tag = 'smem constant byte address 0x4 - core index']
  #allocation1 [shape = 'u32[144,128]{1,0:T(1,128)}', space=vmem, size = 0x12000, scoped, tag = 'internal scratch']
  %s0 = inlined_call_operand.vmem [shape: f32[2,4,320], index: 0, kind: input, shape index: {}]
  %s1 = inlined_call_operand.vmem [shape: f32[9,4,1], index: 1, kind: input, shape index: {}]
  %s2 = inlined_call_operand.vmem [shape: f32[8,8], index: 2, kind: input, shape index: {}]
  %s3 = inlined_call_operand.vmem [shape: f32[2,8,1], index: 3, kind: input, shape index: {}]
  %s4 = inlined_call_operand.hbm [shape: f32[2,8,256], index: 4, kind: output, shape index: {}]
  %s5 = sld [smem:[#allocation0]]
  $region26: #{tpu_custom_call.1} parent=0
    _
  %s7 = ssub.s32 1, %s5
  %s8 = scalar_select 0, %s7, %s5
  $region1: #{tpu_custom_call.1} parent=0
    #allocation2 [shape = 'u8[16384]{0}', space=vmem, size = 0x4000, scoped, tag = 'output window, operand 0, single buffered']
    #allocation3 [shape = 's32[1]{0}', space=sflag, size = 0x4, scoped, tag = 'scoped memory for tpu_custom_call.1']
    %9 = vsyncpa [#allocation3], 0
    // Predicated region
    $region2: #{tpu_custom_call.1} parent=1 // pred_check
      _
    $region3: #{tpu_custom_call.1} parent=1 // pred_check_branch
      %11 = sbr.rel (0) target = $region5
    $region4: #{tpu_custom_call.1} parent=1 // pred_region
      _
    $region5: #{tpu_custom_call.1} parent=1 // pred_fallthru
      _
    // Predicated region
    $region6: #{tpu_custom_call.1} parent=1 // pred_check
      _
    $region7: #{tpu_custom_call.1} parent=1 // pred_check_branch
      %13 = sbr.rel (0) target = $region9
    $region8: #{tpu_custom_call.1} parent=1 // pred_region
      _
    $region9: #{tpu_custom_call.1} parent=1 // pred_fallthru
      _
    // Predicated region
    $region10: #{tpu_custom_call.1} parent=1 // pred_check
      _
    $region11: #{tpu_custom_call.1} parent=1 // pred_check_branch
      %15 = sbr.rel (0) target = $region13
    $region12: #{tpu_custom_call.1} parent=1 // pred_region
      _
    $region13: #{tpu_custom_call.1} parent=1 // pred_fallthru
      _
    // Predicated region
    $region14: #{tpu_custom_call.1} parent=1 // pred_check
      _
    $region15: #{tpu_custom_call.1} parent=1 // pred_check_branch
      %17 = sbr.rel (0) target = $region17
    $region16: #{tpu_custom_call.1} parent=1 // pred_region
      _
    $region17: #{tpu_custom_call.1} parent=1 // pred_fallthru
      _
    %v18 = vld [vmem:[%s0] sm:$0xff]
    %v19 = vld [vmem:[%s0 + $0x8] sm:$0xf]
    %v20 = vld [vmem:[%s0 + $0xc] sm:$0xff]
    %v21 = vld [vmem:[%s0 + $0x14] sm:$0xf]
    %v22 = vld [vmem:[%s1] sm:$0xf]
    %v23 = vld [vmem:[%s1 + $0x4] sm:$0xf]
    %v24 = vld [vmem:[%s1 + $0x8] sm:$0xf]
    %v25 = vld [vmem:[%s1 + $0xc] sm:$0xf]
    %v26 = vld [vmem:[%s1 + $0x10] sm:$0xf]
    %v27 = vld [vmem:[%s1 + $0x14] sm:$0xf]
    %v28 = vld [vmem:[%s1 + $0x18] sm:$0xf]
    %v29 = vld [vmem:[%s1 + $0x1c] sm:$0xf]
    %v30 = vld [vmem:[%s1 + $0x20] sm:$0xf]
    %v31 = vld [vmem:[%s2] sm:$0xff]
    %v32 = vld [vmem:[%s3] sm:$0xff]
    %v33 = vld [vmem:[%s3 + $0x8] sm:$0xff]
    %v34 = vlaneseq
    %v35 = vand.u32 %v34, 127
    %v36 = vadd.s32 %v35, 128
    %vm37 = vcmp.lt.s32.totalorder %v35, 0
    %v38 = vsub.s32 0, %v35
    %v39 = vsel %vm37, %v38, %v35
    %v40 = vshrl.u32 %v39, 4
    %v41 = vand.u32 %v39, 15
    %v42 = vsub.s32 0, %v41
    %v43 = vsel %vm37, %v42, %v41
    %vm44 = vcmp.lt.s32.totalorder %v36, 0
    %v45 = vsub.s32 0, %v36
    %v46 = vsel %vm44, %v45, %v36
    %v47 = vshrl.u32 %v46, 4
    %v48 = vand.u32 %v46, 15
    %v49 = vsub.s32 0, %v48
    %v50 = vsel %vm44, %v49, %v48
    %vm51 = vcmp.ne.s32.totalorder %v43, 0
    %vm52 = vcmp.ne.s32.totalorder %v50, 0
    %vm53 = vcmp.lt.s32.totalorder %v43, 0
    %vm54 = vcmp.lt.s32.totalorder %v50, 0
    %vm55 = vmand %vm53, %vm51
    %vm56 = vmand %vm54, %vm52
    %v57 = vadd.s32 %v43, 16
    %v58 = vadd.s32 %v50, 16
    %v59 = vsel %vm55, %v57, %v43
    %v60 = vsel %vm56, %v58, %v50
    %vm61 = vcmp.ne.s32.totalorder %v59, 0
    %vm62 = vcmp.ne.s32.totalorder %v60, 0
    %v63 = vsel %vm61, 1, 0
    %v64 = vsel %vm62, 1, 0
    %v65 = vcvt.s32.f32 %v63
    %v66 = vcvt.s32.f32 %v64
    %vm67 = vcmp.ne.s32.totalorder %v59, 15
    %vm68 = vcmp.ne.s32.totalorder %v60, 15
    %v69 = vsel %vm67, 1, 0
    %v70 = vsel %vm68, 1, 0
    %v71 = vcvt.s32.f32 %v69
    %v72 = vcvt.s32.f32 %v70
    %74 = vset.pattern.permute.xlu0 0
    %75 = vperm.xlu0 %74, %v26
    %v76 = vpop.permute.xlu0 %75
    %v78 = vunpack.c.l.s4 839922192
    %v79 = vunpack.c.0.s8 %v78
    %v80 = vlaneseq
    %v81 = vshrl.u32 %v80, 7
    %v82 = vsub.s32 %v79, %v81
    %v83 = vrot.slane %v76, %v82
    %v85 = vmul.f32 %v18, %v83
    %v86 = vmul.f32 %v19, %v83
    %v87 = vmul.f32 %v20, %v83
    %v88 = vmul.f32 %v21, %v83
    %90 = vset.pattern.permute.xlu0 0
    %91 = vperm.xlu0 %90, %v23
    %v92 = vpop.permute.xlu0 %91
    %v94 = vunpack.c.l.s4 839922192
    %v95 = vunpack.c.0.s8 %v94
    %v96 = vlaneseq
    %v97 = vshrl.u32 %v96, 7
    %v98 = vsub.s32 %v95, %v97
    %v99 = vrot.slane %v92, %v98
    %v101 = vmul.f32 %v18, %v99
    %v102 = vmul.f32 %v19, %v99
    %v103 = vmul.f32 %v20, %v99
    %v104 = vmul.f32 %v21, %v99
    %109 = vrot.lane.b32.xlu0 %v101, 16
    %v110 = vpop.permute.xlu0 %109
    %111 = vrot.lane.b32.xlu0 %v102, 16
    %v112 = vpop.permute.xlu0 %111
    %113 = vrot.lane.b32.xlu0 %v103, 16
    %v114 = vpop.permute.xlu0 %113
    %115 = vrot.lane.b32.xlu0 %v104, 16
    %v116 = vpop.permute.xlu0 %115
    %v117 = vrot.slane %v110, 4
    %v118 = vrot.slane %v114, 4
    %vm119 = vcmask 130048
    %v120 = vsel %vm119, %v117, %v110
    %v121 = vsel %vm119, %v117, %v112
    %v122 = vsel %vm119, %v118, %v114
    %v123 = vsel %vm119, %v118, %v116
    %v128 = vadd.f32 %v85, %v120
    %v129 = vadd.f32 %v86, %v121
    %v130 = vadd.f32 %v87, %v122
    %v131 = vadd.f32 %v88, %v123
    %133 = vset.pattern.permute.xlu0 0
    %134 = vperm.xlu0 %133, %v29
    %v135 = vpop.permute.xlu0 %134
    %v137 = vunpack.c.l.s4 839922192
    %v138 = vunpack.c.0.s8 %v137
    %v139 = vlaneseq
    %v140 = vshrl.u32 %v139, 7
    %v141 = vsub.s32 %v138, %v140
    %v142 = vrot.slane %v135, %v141
    %v144 = vmul.f32 %v18, %v142
    %v145 = vmul.f32 %v19, %v142
    %v146 = vmul.f32 %v20, %v142
    %v147 = vmul.f32 %v21, %v142
    %152 = vrot.lane.b32.xlu0 %v144, 112
    %v153 = vpop.permute.xlu0 %152
    %154 = vrot.lane.b32.xlu0 %v145, 112
    %v155 = vpop.permute.xlu0 %154
    %156 = vrot.lane.b32.xlu0 %v146, 112
    %v157 = vpop.permute.xlu0 %156
    %158 = vrot.lane.b32.xlu0 %v147, 112
    %v159 = vpop.permute.xlu0 %158
    %v160 = vrot.slane %v153, 4
    %v161 = vrot.slane %v155, 4
    %v162 = vrot.slane %v157, 4
    %v163 = vrot.slane %v159, 4
    %vm164 = vcmask 1043456
    %v165 = vsel %vm164, %v160, %v161
    %vm166 = vcmask 916480
    %v167 = vsel %vm166, %v153, %v165
    %v168 = vsel %vm164, %v162, %v163
    %v169 = vsel %vm166, %v157, %v168
    %v174 = vadd.f32 %v128, %v167
    %v175 = vadd.f32 %v129, %v155
    %v176 = vadd.f32 %v130, %v169
    %v177 = vadd.f32 %v131, %v159
    %179 = vset.pattern.permute.xlu0 0
    %180 = vperm.xlu0 %179, %v22
    %v181 = vpop.permute.xlu0 %180
    %v183 = vunpack.c.l.s4 839922192
    %v184 = vunpack.c.0.s8 %v183
    %v185 = vlaneseq
    %v186 = vshrl.u32 %v185, 7
    %v187 = vsub.s32 %v184, %v186
    %v188 = vrot.slane %v181, %v187
    %v190 = vmul.f32 %v18, %v188
    %v191 = vmul.f32 %v19, %v188
    %v192 = vmul.f32 %v20, %v188
    %v193 = vmul.f32 %v21, %v188
    %195 = vset.pattern.permute.xlu0 0
    %196 = vperm.xlu0 %195, %v25
    %v197 = vpop.permute.xlu0 %196
    %v199 = vunpack.c.l.s4 839922192
    %v200 = vunpack.c.0.s8 %v199
    %v201 = vlaneseq
    %v202 = vshrl.u32 %v201, 7
    %v203 = vsub.s32 %v200, %v202
    %v204 = vrot.slane %v197, %v203
    %v206 = vmul.f32 %v18, %v204
    %v207 = vmul.f32 %v19, %v204
    %v208 = vmul.f32 %v20, %v204
    %v209 = vmul.f32 %v21, %v204
    %214 = vrot.lane.b32.xlu0 %v206, 112
    %v215 = vpop.permute.xlu0 %214
    %216 = vrot.lane.b32.xlu0 %v207, 112
    %v217 = vpop.permute.xlu0 %216
    %218 = vrot.lane.b32.xlu0 %v208, 112
    %v219 = vpop.permute.xlu0 %218
    %220 = vrot.lane.b32.xlu0 %v209, 112
    %v221 = vpop.permute.xlu0 %220
    %v222 = vrot.slane %v215, 4
    %v223 = vrot.slane %v217, 4
    %v224 = vrot.slane %v219, 4
    %v225 = vrot.slane %v221, 4
    %v226 = vsel %vm164, %v222, %v223
    %v227 = vsel %vm166, %v215, %v226
    %v228 = vsel %vm164, %v224, %v225
    %v229 = vsel %vm166, %v219, %v228
    %v234 = vadd.f32 %v190, %v227
    %v235 = vadd.f32 %v191, %v217
    %v236 = vadd.f32 %v192, %v229
    %v237 = vadd.f32 %v193, %v221
    %239 = vset.pattern.permute.xlu0 0
    %240 = vperm.xlu0 %239, %v28
    %v241 = vpop.permute.xlu0 %240
    %v243 = vunpack.c.l.s4 839922192
    %v244 = vunpack.c.0.s8 %v243
    %v245 = vlaneseq
    %v246 = vshrl.u32 %v245, 7
    %v247 = vsub.s32 %v244, %v246
    %v248 = vrot.slane %v241, %v247
    %v250 = vmul.f32 %v18, %v248
    %v251 = vmul.f32 %v19, %v248
    %v252 = vmul.f32 %v20, %v248
    %v253 = vmul.f32 %v21, %v248
    %258 = vrot.lane.b32.xlu0 %v250, 96
    %v259 = vpop.permute.xlu0 %258
    %260 = vrot.lane.b32.xlu0 %v251, 96
    %v261 = vpop.permute.xlu0 %260
    %262 = vrot.lane.b32.xlu0 %v252, 96
    %v263 = vpop.permute.xlu0 %262
    %264 = vrot.lane.b32.xlu0 %v253, 96
    %v265 = vpop.permute.xlu0 %264
    %v266 = vrot.slane %v259, 4
    %v267 = vrot.slane %v261, 4
    %v268 = vrot.slane %v263, 4
    %v269 = vrot.slane %v265, 4
    %v270 = vsel %vm164, %v266, %v267
    %vm271 = vcmask 785408
    %v272 = vsel %vm271, %v259, %v270
    %v273 = vsel %vm164, %v268, %v269
    %v274 = vsel %vm271, %v263, %v273
    %v279 = vadd.f32 %v234, %v272
    %v280 = vadd.f32 %v235, %v261
    %v281 = vadd.f32 %v236, %v274
    %v282 = vadd.f32 %v237, %v265
    %v285 = vcombine.low %v65, %v66
    %286 = vrot.lane.b32.xlu0 %v285, 15
    %v287 = vpop.permute.xlu0 %286
    %v288 = vrot.slane %v287, 4
    %vm289 = vcmask 121856
    %v290 = vsel %vm289, %v288, %v287
    %v293 = vmul.f32 %v279, %v290
    %v294 = vmul.f32 %v280, %v288
    %v295 = vmul.f32 %v281, %v290
    %v296 = vmul.f32 %v282, %v288
    %301 = vrot.lane.b32.xlu0 %v293, 17
    %v302 = vpop.permute.xlu0 %301
    %303 = vrot.lane.b32.xlu0 %v294, 17
    %v304 = vpop.permute.xlu0 %303
    %305 = vrot.lane.b32.xlu0 %v295, 17
    %v306 = vpop.permute.xlu0 %305
    %307 = vrot.lane.b32.xlu0 %v296, 17
    %v308 = vpop.permute.xlu0 %307
    %v309 = vrot.slane %v302, 4
    %v310 = vrot.slane %v306, 4
    %vm311 = vcmask 138240
    %v312 = vsel %vm311, %v309, %v302
    %v313 = vsel %vm311, %v309, %v304
    %v314 = vsel %vm311, %v310, %v306
    %v315 = vsel %vm311, %v310, %v308
    %v320 = vadd.f32 %v174, %v312
    %v321 = vadd.f32 %v175, %v313
    %v322 = vadd.f32 %v176, %v314
    %v323 = vadd.f32 %v177, %v315
    %325 = vset.pattern.permute.xlu0 0
    %326 = vperm.xlu0 %325, %v24
    %v327 = vpop.permute.xlu0 %326
    %v329 = vunpack.c.l.s4 839922192
    %v330 = vunpack.c.0.s8 %v329
    %v331 = vlaneseq
    %v332 = vshrl.u32 %v331, 7
    %v333 = vsub.s32 %v330, %v332
    %v334 = vrot.slane %v327, %v333
    %v336 = vmul.f32 %v18, %v334
    %v337 = vmul.f32 %v19, %v334
    %v338 = vmul.f32 %v20, %v334
    %v339 = vmul.f32 %v21, %v334
    %341 = vset.pattern.permute.xlu0 0
    %342 = vperm.xlu0 %341, %v27
    %v343 = vpop.permute.xlu0 %342
    %v345 = vunpack.c.l.s4 839922192
    %v346 = vunpack.c.0.s8 %v345
    %v347 = vlaneseq
    %v348 = vshrl.u32 %v347, 7
    %v349 = vsub.s32 %v346, %v348
    %v350 = vrot.slane %v343, %v349
    %v352 = vmul.f32 %v18, %v350
    %v353 = vmul.f32 %v19, %v350
    %v354 = vmul.f32 %v20, %v350
    %v355 = vmul.f32 %v21, %v350
    %360 = vrot.lane.b32.xlu0 %v352, 112
    %v361 = vpop.permute.xlu0 %360
    %362 = vrot.lane.b32.xlu0 %v353, 112
    %v363 = vpop.permute.xlu0 %362
    %364 = vrot.lane.b32.xlu0 %v354, 112
    %v365 = vpop.permute.xlu0 %364
    %366 = vrot.lane.b32.xlu0 %v355, 112
    %v367 = vpop.permute.xlu0 %366
    %v368 = vrot.slane %v361, 4
    %v369 = vrot.slane %v363, 4
    %v370 = vrot.slane %v365, 4
    %v371 = vrot.slane %v367, 4
    %v372 = vsel %vm164, %v368, %v369
    %v373 = vsel %vm166, %v361, %v372
    %v374 = vsel %vm164, %v370, %v371
    %v375 = vsel %vm166, %v365, %v374
    %v380 = vadd.f32 %v336, %v373
    %v381 = vadd.f32 %v337, %v363
    %v382 = vadd.f32 %v338, %v375
    %v383 = vadd.f32 %v339, %v367
    %385 = vset.pattern.permute.xlu0 0
    %386 = vperm.xlu0 %385, %v30
    %v387 = vpop.permute.xlu0 %386
    %v389 = vunpack.c.l.s4 839922192
    %v390 = vunpack.c.0.s8 %v389
    %v391 = vlaneseq
    %v392 = vshrl.u32 %v391, 7
    %v393 = vsub.s32 %v390, %v392
    %v394 = vrot.slane %v387, %v393
    %v396 = vmul.f32 %v18, %v394
    %v397 = vmul.f32 %v19, %v394
    %v398 = vmul.f32 %v20, %v394
    %v399 = vmul.f32 %v21, %v394
    %404 = vrot.lane.b32.xlu0 %v396, 96
    %v405 = vpop.permute.xlu0 %404
    %406 = vrot.lane.b32.xlu0 %v397, 96
    %v407 = vpop.permute.xlu0 %406
    %408 = vrot.lane.b32.xlu0 %v398, 96
    %v409 = vpop.permute.xlu0 %408
    %410 = vrot.lane.b32.xlu0 %v399, 96
    %v411 = vpop.permute.xlu0 %410
    %v412 = vrot.slane %v405, 4
    %v413 = vrot.slane %v407, 4
    %v414 = vrot.slane %v409, 4
    %v415 = vrot.slane %v411, 4
    %v416 = vsel %vm164, %v412, %v413
    %v417 = vsel %vm271, %v405, %v416
    %v418 = vsel %vm164, %v414, %v415
    %v419 = vsel %vm271, %v409, %v418
    %v424 = vadd.f32 %v380, %v417
    %v425 = vadd.f32 %v381, %v407
    %v426 = vadd.f32 %v382, %v419
    %v427 = vadd.f32 %v383, %v411
    %v430 = vcombine.low %v71, %v72
    %431 = vrot.lane.b32.xlu0 %v430, 17
    %v432 = vpop.permute.xlu0 %431
    %v433 = vrot.slane %v432, 4
    %v434 = vsel %vm311, %v433, %v432
    %v437 = vmul.f32 %v424, %v434
    %v438 = vmul.f32 %v425, %v433
    %v439 = vmul.f32 %v426, %v434
    %v440 = vmul.f32 %v427, %v433
    %445 = vrot.lane.b32.xlu0 %v437, 15
    %v446 = vpop.permute.xlu0 %445
    %447 = vrot.lane.b32.xlu0 %v438, 15
    %v448 = vpop.permute.xlu0 %447
    %449 = vrot.lane.b32.xlu0 %v439, 15
    %v450 = vpop.permute.xlu0 %449
    %451 = vrot.lane.b32.xlu0 %v440, 15
    %v452 = vpop.permute.xlu0 %451
    %v453 = vrot.slane %v446, 4
    %v454 = vrot.slane %v450, 4
    %v455 = vsel %vm289, %v453, %v446
    %v456 = vsel %vm289, %v453, %v448
    %v457 = vsel %vm289, %v454, %v450
    %v458 = vsel %vm289, %v454, %v452
    %v463 = vadd.f32 %v320, %v455
    %v464 = vadd.f32 %v321, %v456
    %v465 = vadd.f32 %v322, %v457
    %v466 = vadd.f32 %v323, %v458
    %v468 = vcombine.high %v463, %v463
    %v472 = vcombine.low %v18, %v18
    %v473 = vcombine.low %v19, %v19
    %v476 = vsel %vm164, %v463, %v472
    %v477 = vsel %vm164, %v468, %v18
    %v478 = vsel %vm164, %v464, %v473
    %480 = vset.pattern.permute.xlu0 0
    %481 = vperm.xlu0 %480, %v32
    %v482 = vpop.permute.xlu0 %481
    %487 = vrot.lane.b32.xlu0 %v476, 96
    %v488 = vpop.permute.xlu0 %487
    %489 = vrot.lane.b32.xlu0 %v477, 96
    %v490 = vpop.permute.xlu0 %489
    %491 = vrot.lane.b32.xlu0 %v478, 96
    %v492 = vpop.permute.xlu0 %491
    %v493 = vsel %vm271, %v488, %v490
    %v494 = vsel %vm271, %v490, %v492
    %vm497 = vcmask 64512
    %v499 = vsel %vm497, %v31, 0
    %501 = vmatprep.subr.mxu0 0.0
    %502 = vmatpush1.msra.mxu0 0.0
    %503 = vmatprep.subr.mxu0 0.0
    %504 = vmatpush1.msra.mxu0 0.0
    %505 = vmatprep.subr.mxu0 0.0
    %506 = vmatpush1.msra.mxu0 0.0
    %507 = vmatprep.subr.mxu0 0.0
    %508 = vmatpush1.msra.mxu0 0.0
    %509 = vmatprep.subr.mxu0 0.0
    %510 = vmatpush1.msra.mxu0 0.0
    %511 = vmatprep.subr.mxu0 0.0
    %512 = vmatpush1.msra.mxu0 0.0
    %513 = vmatprep.subr.mxu0 0.0
    %514 = vmatpush1.msra.mxu0 0.0
    %515 = vmatprep.subr.mxu0 0.0
    %516 = vmatpush1.msra.mxu0 0.0
    %517 = vmatprep.subr.mxu0 0.0
    %518 = vmatpush1.msra.mxu0 0.0
    %519 = vmatprep.subr.mxu0 0.0
    %520 = vmatpush1.msra.mxu0 0.0
    %521 = vmatprep.subr.mxu0 0.0
    %522 = vmatpush1.msra.mxu0 0.0
    %523 = vmatprep.subr.mxu0 0.0
    %524 = vmatpush1.msra.mxu0 0.0
    %525 = vmatprep.subr.mxu0 0.0
    %526 = vmatpush1.msra.mxu0 0.0
    %527 = vmatprep.subr.mxu0 0.0
    %528 = vmatpush1.msra.mxu0 0.0
    %529 = vmatprep.subr.mxu0 0.0
    %530 = vmatpush1.msra.mxu0 0.0
    %531 = vmatprep.subr.mxu0 %v494
    %532 = vmatpush1.msra.mxu0 %v493
    %533 = vmatprep.subr.mxu0 0.0
    %534 = vmatpush2.msra.mxu0 0.0
    %535 = vmatprep.subr.mxu0 0.0
    %536 = vmatpush2.msra.mxu0 0.0
    %537 = vmatprep.subr.mxu0 0.0
    %538 = vmatpush2.msra.mxu0 0.0
    %539 = vmatprep.subr.mxu0 0.0
    %540 = vmatpush2.msra.mxu0 0.0
    %541 = vmatprep.subr.mxu0 0.0
    %542 = vmatpush2.msra.mxu0 0.0
    %543 = vmatprep.subr.mxu0 0.0
    %544 = vmatpush2.msra.mxu0 0.0
    %545 = vmatprep.subr.mxu0 0.0
    %546 = vmatpush2.msra.mxu0 0.0
    %547 = vmatprep.subr.mxu0 0.0
    %548 = vmatpush2.msra.mxu0 0.0
    %549 = vmatprep.subr.mxu0 0.0
    %550 = vmatpush2.msra.mxu0 0.0
    %551 = vmatprep.subr.mxu0 0.0
    %552 = vmatpush2.msra.mxu0 0.0
    %553 = vmatprep.subr.mxu0 0.0
    %554 = vmatpush2.msra.mxu0 0.0
    %555 = vmatprep.subr.mxu0 0.0
    %556 = vmatpush2.msra.mxu0 0.0
    %557 = vmatprep.subr.mxu0 0.0
    %558 = vmatpush2.msra.mxu0 0.0
    %559 = vmatprep.subr.mxu0 0.0
    %560 = vmatpush2.msra.mxu0 0.0
    %561 = vmatprep.subr.mxu0 0.0
    %562 = vmatpush2.msra.mxu0 0.0
    %563 = vmatprep.subr.mxu0 0.0
    %564 = vmatpush2.msra.mxu0 0.0
    %565 = vmatprep.mubr.f32.mxu0 0.0
    %566 = vmatmul.mubr.f32.gmra.mxu0 %v499
    %v567 = vpop.f32.mrf.mxu0
    %v568 = vadd.f32 %v482, %v567
    %v569 = vpop.f32.mrf.mxu0
    %v570 = vadd.f32 %v482, %v569
    %571 = vdwg.mxu0
    %vm572 = vcmp.gt.f32.partialorder %v568, 0.0
    %vm573 = vcmp.gt.f32.partialorder %v570, 0.0
    %575 = vset.pattern.permute.xlu0 0
    %576 = vperm.xlu0 %575, %v33
    %v577 = vpop.permute.xlu0 %576
    %v579 = vmul.f32 %v577, %v568
    %v580 = vmul.f32 %v577, %v570
    %v581 = vsel %vm572, %v568, %v579
    %v582 = vsel %vm573, %v570, %v580
    %583 = vst [vmem:[#allocation2] sm:$0xff] %v581
    %584 = vst [vmem:[#allocation2 + $0x8] sm:$0xff] %v582
    %v586 = vcombine.high %v465, %v465
    %v590 = vcombine.low %v20, %v20
    %v591 = vcombine.low %v21, %v21
    %v594 = vsel %vm164, %v465, %v590
    %v595 = vsel %vm164, %v586, %v20
    %v596 = vsel %vm164, %v466, %v591
    %600 = vrot.lane.b32.xlu0 %v594, 96
    %v601 = vpop.permute.xlu0 %600
    %602 = vrot.lane.b32.xlu0 %v595, 96
    %v603 = vpop.permute.xlu0 %602
    %604 = vrot.lane.b32.xlu0 %v596, 96
    %v605 = vpop.permute.xlu0 %604
    %v606 = vsel %vm271, %v601, %v603
    %v607 = vsel %vm271, %v603, %v605
    %610 = vmatprep.subr.mxu0 0.0
    %611 = vmatpush1.msra.mxu0 0.0
    %612 = vmatprep.subr.mxu0 0.0
    %613 = vmatpush1.msra.mxu0 0.0
    %614 = vmatprep.subr.mxu0 0.0
    %615 = vmatpush1.msra.mxu0 0.0
    %616 = vmatprep.subr.mxu0 0.0
    %617 = vmatpush1.msra.mxu0 0.0
    %618 = vmatprep.subr.mxu0 0.0
    %619 = vmatpush1.msra.mxu0 0.0
    %620 = vmatprep.subr.mxu0 0.0
    %621 = vmatpush1.msra.mxu0 0.0
    %622 = vmatprep.subr.mxu0 0.0
    %623 = vmatpush1.msra.mxu0 0.0
    %624 = vmatprep.subr.mxu0 0.0
    %625 = vmatpush1.msra.mxu0 0.0
    %626 = vmatprep.subr.mxu0 0.0
    %627 = vmatpush1.msra.mxu0 0.0
    %628 = vmatprep.subr.mxu0 0.0
    %629 = vmatpush1.msra.mxu0 0.0
    %630 = vmatprep.subr.mxu0 0.0
    %631 = vmatpush1.msra.mxu0 0.0
    %632 = vmatprep.subr.mxu0 0.0
    %633 = vmatpush1.msra.mxu0 0.0
    %634 = vmatprep.subr.mxu0 0.0
    %635 = vmatpush1.msra.mxu0 0.0
    %636 = vmatprep.subr.mxu0 0.0
    %637 = vmatpush1.msra.mxu0 0.0
    %638 = vmatprep.subr.mxu0 0.0
    %639 = vmatpush1.msra.mxu0 0.0
    %640 = vmatprep.subr.mxu0 %v607
    %641 = vmatpush1.msra.mxu0 %v606
    %642 = vmatprep.subr.mxu0 0.0
    %643 = vmatpush2.msra.mxu0 0.0
    %644 = vmatprep.subr.mxu0 0.0
    %645 = vmatpush2.msra.mxu0 0.0
    %646 = vmatprep.subr.mxu0 0.0
    %647 = vmatpush2.msra.mxu0 0.0
    %648 = vmatprep.subr.mxu0 0.0
    %649 = vmatpush2.msra.mxu0 0.0
    %650 = vmatprep.subr.mxu0 0.0
    %651 = vmatpush2.msra.mxu0 0.0
    %652 = vmatprep.subr.mxu0 0.0
    %653 = vmatpush2.msra.mxu0 0.0
    %654 = vmatprep.subr.mxu0 0.0
    %655 = vmatpush2.msra.mxu0 0.0
    %656 = vmatprep.subr.mxu0 0.0
    %657 = vmatpush2.msra.mxu0 0.0
    %658 = vmatprep.subr.mxu0 0.0
    %659 = vmatpush2.msra.mxu0 0.0
    %660 = vmatprep.subr.mxu0 0.0
    %661 = vmatpush2.msra.mxu0 0.0
    %662 = vmatprep.subr.mxu0 0.0
    %663 = vmatpush2.msra.mxu0 0.0
    %664 = vmatprep.subr.mxu0 0.0
    %665 = vmatpush2.msra.mxu0 0.0
    %666 = vmatprep.subr.mxu0 0.0
    %667 = vmatpush2.msra.mxu0 0.0
    %668 = vmatprep.subr.mxu0 0.0
    %669 = vmatpush2.msra.mxu0 0.0
    %670 = vmatprep.subr.mxu0 0.0
    %671 = vmatpush2.msra.mxu0 0.0
    %672 = vmatprep.subr.mxu0 0.0
    %673 = vmatpush2.msra.mxu0 0.0
    %674 = vmatprep.mubr.f32.mxu0 0.0
    %675 = vmatmul.mubr.f32.gmra.mxu0 %v499
    %v676 = vpop.f32.mrf.mxu0
    %v677 = vadd.f32 %v482, %v676
    %v678 = vpop.f32.mrf.mxu0
    %v679 = vadd.f32 %v482, %v678
    %680 = vdwg.mxu0
    %vm681 = vcmp.gt.f32.partialorder %v677, 0.0
    %vm682 = vcmp.gt.f32.partialorder %v679, 0.0
    %v683 = vmul.f32 %v577, %v677
    %v684 = vmul.f32 %v577, %v679
    %v685 = vsel %vm681, %v677, %v683
    %v686 = vsel %vm682, %v679, %v684
    %s687 = scalar_lea.vmem [#allocation2], 16
    %688 = vst [vmem:[%s687] sm:$0xff] %v685
    %689 = vst [vmem:[%s687 + $0x8] sm:$0xff] %v686
    // Predicated region
    $region18: #{tpu_custom_call.1} parent=1 // pred_check
      _
    $region19: #{tpu_custom_call.1} parent=1 // pred_check_branch
      %691 = sbr.rel (0) target = $region21
    $region20: #{tpu_custom_call.1} parent=1 // pred_region
      %s693 = ssub.s32 512, 512
      %694 = vsyncadd [#allocation3], %s693
      %s695 = sshll.u32 [#allocation2], 4
      %s696 = int_to_ptr.vmem [resolvable:$true] %s695
      %701 = dma.vmem_to_hbm [thread:$0]  %s696, 512, %s4, [#allocation3], 256, 256, 16
    $region21: #{tpu_custom_call.1} parent=1 // pred_fallthru
      _
    // Predicated region
    $region22: #{tpu_custom_call.1} parent=1 // pred_check
      _
    $region23: #{tpu_custom_call.1} parent=1 // pred_check_branch
      %703 = sbr.rel (0) target = $region25
    $region24: #{tpu_custom_call.1} parent=1 // pred_region
      %704 = dma.done [#allocation3], 512
    $region25: #{tpu_custom_call.1} parent=1 // pred_fallthru
      _
    %705 = vsyncpa [#allocation3], 1

</llo_original>
